<compile_context>
chip_gen: v6e
topology: v6e:2x2x1
jax: 0.10.0
libtpu: 0.0.40
codegen_flags: <defaults>
</compile_context>

<pallas_src>
import functools

import jax
import jax.numpy as jnp
from jax.experimental import pallas as pl
from jax.experimental.pallas import tpu as pltpu

DESIRED_ALPHA = -6.0                      # module default desired_alpha=-6
_HALF_LOG_2PI = 0.5 * float(jnp.log(2.0 * jnp.pi))
_LANE = 128
_SUB = 8
_MAX_ROW_TILE = 2048                      # 2048x128 f32 = 1 MiB/input tile; x3 inputs x2 bufs = 6 MiB
_SMALL_N = 1 << 14                        # below this the fused jnp path beats pallas dispatch
_NUM_CORES = 2                            # v7x megacore split; serial outer iterations on v5e/v6e


def _cdiv(a, b):
    return -(-a // b)


def _round_up(a, b):
    return _cdiv(a, b) * b


def _logprob_core_sum_kernel(mean_ref, std_ref, act_ref, out_ref, *,
                             row_tile, steps_per_core, n_true, needs_mask):
    c = pl.program_id(0)        # outer "core" axis (parallel)
    i = pl.program_id(1)        # inner row-tile axis (arbitrary / reduction)

    # Resident per-core accumulator: re-zero whenever a new core slice begins.
    @pl.when(i == 0)
    def _():
        out_ref[...] = jnp.zeros_like(out_ref)

    mean = mean_ref[...].astype(jnp.float32)
    std = std_ref[...].astype(jnp.float32)
    act = act_ref[...].astype(jnp.float32)

    # Per-element "core" of the Normal log-prob: -0.5*z^2 - log(std).
    # (The -0.5*log(2*pi) constant, alpha and desired_alpha are applied once in
    #  the wrapper; exact divide — kernel is HBM-bound, VPU/EUP slack is large.)
    # TODO(synk): if log_std is available upstream (std = exp(log_std)), take it
    # directly: log(std) becomes a pass-through and 1/std = exp(-log_std).
    z = (act - mean) / std
    core = -0.5 * (z * z) - jnp.log(std)

    if needs_mask:
        # Tail masking against the true element count. Handles the final partial
        # block (Pallas pads boundary blocks with undefined values) and any
        # fully out-of-range phantom block on the last core (clamped index_map).
        row0 = (c * steps_per_core + i) * row_tile
        rid = jax.lax.broadcasted_iota(jnp.int32, (row_tile, _LANE), 0)
        lid = jax.lax.broadcasted_iota(jnp.int32, (row_tile, _LANE), 1)
        eidx = (row0 + rid) * _LANE + lid
        core = jnp.where(eidx < n_true, core, 0.0)

    # Lane-dense (8,128) vreg-shaped partial sums: pure VPU adds in the hot loop,
    # no XLU cross-lane reduce, no masked single-lane store.
    out_ref[...] += core.reshape(1, row_tile // _SUB, _SUB, _LANE).sum(axis=1)


def _logprob_core_sum_pallas(mean, std, actions, *, max_row_tile=_MAX_ROW_TILE):
    """Returns (sum over elements of -0.5*z^2 - log(std), true element count)."""
    n_true = int(mean.size)
    mean_f = jnp.ravel(mean)
    std_f = jnp.ravel(std)
    act_f = jnp.ravel(actions)

    rows = _cdiv(n_true, _LANE)
    pad = rows * _LANE - n_true
    if pad:
        # <=127-element pad purely so the flat buffer reshapes to (rows, 128);
        # never rounded up to a full row tile (tails are masked in-kernel).
        mean_f = jnp.concatenate([mean_f, jnp.zeros((pad,), mean_f.dtype)])
        act_f = jnp.concatenate([act_f, jnp.zeros((pad,), act_f.dtype)])
        std_f = jnp.concatenate([std_f, jnp.ones((pad,), std_f.dtype)])

    mean2 = mean_f.reshape(rows, _LANE)
    std2 = std_f.reshape(rows, _LANE)
    act2 = act_f.reshape(rows, _LANE)

    row_tile = min(_round_up(rows, _SUB), _round_up(max_row_tile, _SUB))
    steps_total = _cdiv(rows, row_tile)
    nc = _NUM_CORES if steps_total >= _NUM_CORES else 1
    steps_per_core = _cdiv(steps_total, nc)
    needs_mask = nc * steps_per_core * row_tile * _LANE != n_true

    def in_map(c, i):
        # Clamp so a phantom trailing block on the last core never indexes past
        # the array; its contribution is fully masked to zero in the kernel.
        return (jnp.minimum(c * steps_per_core + i, steps_total - 1), 0)

    tile_spec = pl.BlockSpec((row_tile, _LANE), in_map)
    kernel = functools.partial(
        _logprob_core_sum_kernel,
        row_tile=row_tile, steps_per_core=steps_per_core,
        n_true=n_true, needs_mask=needs_mask)

    out = pl.pallas_call(
        kernel,
        out_shape=jax.ShapeDtypeStruct((nc, _SUB, _LANE), jnp.float32),
        grid_spec=pltpu.PrefetchScalarGridSpec(
            num_scalar_prefetch=0,
            grid=(nc, steps_per_core),
            in_specs=[tile_spec, tile_spec, tile_spec],
            out_specs=pl.BlockSpec((1, _SUB, _LANE), lambda c, i: (c, 0, 0)),
        ),
        compiler_params=pltpu.CompilerParams(
            dimension_semantics=("parallel", "arbitrary"),
            vmem_limit_bytes=32 * 1024 * 1024),
    )(mean2, std2, act2)

    # Single tiny cross-lane reduce, outside the hot loop.
    return jnp.sum(out), n_true


def temperature_loss(mean, std, actions, alpha,
                     desired_alpha=DESIRED_ALPHA, use_pallas=None):
    """SAC temperature loss: mean(-alpha*log_prob - alpha*desired_alpha).

    log_prob is treated as a constant (torch's .detach()): it is wrapped in
    stop_gradient, so jax.grad w.r.t. alpha flows and grads w.r.t.
    mean/std/actions are exactly zero.
    """
    if use_pallas is None:
        use_pallas = mean.size >= _SMALL_N
    if use_pallas:
        core_sum, n = _logprob_core_sum_pallas(mean, std, actions)
        mean_log_prob = core_sum / jnp.float32(n) - _HALF_LOG_2PI
    else:
        # Tiny SAC batches: one fused XLA kernel beats the pallas dispatch path.
        m = mean.astype(jnp.float32)
        s = std.astype(jnp.float32)
        a = actions.astype(jnp.float32)
        z = (a - m) / s
        mean_log_prob = jnp.mean(-0.5 * z * z - jnp.log(s)) - _HALF_LOG_2PI
    mean_log_prob = jax.lax.stop_gradient(mean_log_prob)
    alpha32 = jnp.asarray(alpha, jnp.float32)
    return -alpha32 * (mean_log_prob + jnp.float32(desired_alpha))


def temperature_loss_ref(mean, std, actions, alpha, desired_alpha=DESIRED_ALPHA):
    z = (actions - mean) / std
    log_prob = -0.5 * z * z - jnp.log(std) - _HALF_LOG_2PI
    return jnp.mean(-alpha * log_prob - alpha * desired_alpha)


if __name__ == "__main__":
    key = jax.random.PRNGKey(0)

    def make(shape, k):
        km, ks, ka, kal = jax.random.split(k, 4)
        mean = jax.random.normal(km, shape, jnp.float32)
        std = jax.nn.softplus(jax.random.normal(ks, shape, jnp.float32)) + 0.1
        act = jax.random.normal(ka, shape, jnp.float32)
        alpha = jnp.exp(0.1 * jax.random.normal(kal, (), jnp.float32))
        return mean, std, act, alpha

    k1, k2, k3 = jax.random.split(key, 3)

    # 1) Typical small SAC shape, Pallas path forced (single partial block, masked tail).
    m, s, a, al = make((8, 32), k1)
    loss = temperature_loss(m, s, a, al, use_pallas=True)
    jax.block_until_ready(loss)
    ref = temperature_loss_ref(m, s, a, al)
    assert jnp.allclose(loss, ref, rtol=1e-5, atol=1e-5), (loss, ref)

    # 2) Non-128-divisible size with a tiny row tile: exercises the 128-pad,
    #    the partial last block, the clamped phantom block, both outer-axis
    #    ("megacore") slices and multi-step inner accumulation.
    m, s, a, al = make((33, 75), k2)          # 2475 elements -> 20 rows of 128
    core_sum, n = _logprob_core_sum_pallas(m, s, a, max_row_tile=8)
    jax.block_until_ready(core_sum)
    z = (a - m) / s
    ref_sum = jnp.sum(-0.5 * z * z - jnp.log(s))
    assert n == 33 * 75
    assert jnp.allclose(core_sum, ref_sum, rtol=1e-4, atol=1e-2), (core_sum, ref_sum)

    # 3) Exactly 128-divisible size: no padding, no masking, exact block.
    m, s, a, al = make((16, 64), k3)
    loss = temperature_loss(m, s, a, al, use_pallas=True)
    jax.block_until_ready(loss)
    ref = temperature_loss_ref(m, s, a, al)
    assert jnp.allclose(loss, ref, rtol=1e-5, atol=1e-5), (loss, ref)

    # 4) Auto path at tiny size uses the fused jnp expression.
    m, s, a, al = make((8, 32), k1)
    loss_auto = temperature_loss(m, s, a, al)
    jax.block_until_ready(loss_auto)
    ref = temperature_loss_ref(m, s, a, al)
    assert jnp.allclose(loss_auto, ref, rtol=1e-5, atol=1e-5), (loss_auto, ref)

    print("KERNEL_OK")
</pallas_src>

<mosaic_0001>
module attributes {stable_mosaic.version = 11 : i64} {
  func.func @_logprob_core_sum_kernel(%arg0: i32, %arg1: i32, %arg2: memref<8x128xf32, #tpu.memory_space<vmem>>, %arg3: memref<8x128xf32, #tpu.memory_space<vmem>>, %arg4: memref<8x128xf32, #tpu.memory_space<vmem>>, %arg5: memref<1x8x128xf32, #tpu.memory_space<vmem>>) attributes {dimension_semantics = [#tpu.dimension_semantics<parallel>, #tpu.dimension_semantics<arbitrary>], iteration_bounds = array<i64: 1, 1>, scalar_prefetch = 0 : i64, scratch_operands = 0 : i64, tpu.core_type = #tpu.core_type<tc>, window_params = [{transform_indices = @transform_0, window_bounds = array<i64: 8, 128>}, {transform_indices = @transform_1, window_bounds = array<i64: 8, 128>}, {transform_indices = @transform_2, window_bounds = array<i64: 8, 128>}, {transform_indices = @transform_3, window_bounds = array<i64: 1, 8, 128>}]} {
    %c0_i32 = arith.constant 0 : i32
    %0 = arith.cmpi eq, %arg1, %c0_i32 : i32
    %1 = arith.extui %0 : i1 to i32
    %c0_i32_0 = arith.constant 0 : i32
    %2 = arith.cmpi ne, %1, %c0_i32_0 : i32
    scf.if %2 {
      %cst_14 = arith.constant 0.000000e+00 : f32
      %32 = vector.broadcast %cst_14 : f32 to vector<1x8x128xf32>
      %c0_15 = arith.constant 0 : index
      %c0_16 = arith.constant 0 : index
      %c0_17 = arith.constant 0 : index
      %33 = vector.load %arg5[%c0_15, %c0_16, %c0_17] : memref<1x8x128xf32, #tpu.memory_space<vmem>>, vector<1x8x128xf32>
      tpu.vector_store %arg5[%c0_15, %c0_16, %c0_17], %32 {strides = array<i32>} : memref<1x8x128xf32, #tpu.memory_space<vmem>>, vector<1x8x128xf32>,
    } else {
    }
    %c0 = arith.constant 0 : index
    %c0_1 = arith.constant 0 : index
    %3 = vector.load %arg2[%c0, %c0_1] : memref<8x128xf32, #tpu.memory_space<vmem>>, vector<8x128xf32>
    %c0_2 = arith.constant 0 : index
    %c0_3 = arith.constant 0 : index
    %4 = vector.load %arg3[%c0_2, %c0_3] : memref<8x128xf32, #tpu.memory_space<vmem>>, vector<8x128xf32>
    %c0_4 = arith.constant 0 : index
    %c0_5 = arith.constant 0 : index
    %5 = vector.load %arg4[%c0_4, %c0_5] : memref<8x128xf32, #tpu.memory_space<vmem>>, vector<8x128xf32>
    %6 = arith.subf %5, %3 : vector<8x128xf32>
    %7 = arith.divf %6, %4 : vector<8x128xf32>
    %8 = arith.mulf %7, %7 : vector<8x128xf32>
    %cst = arith.constant -5.000000e-01 : f32
    %9 = vector.broadcast %cst : f32 to vector<8x128xf32>
    %10 = arith.mulf %9, %8 : vector<8x128xf32>
    %11 = math.log %4 : vector<8x128xf32>
    %12 = arith.subf %10, %11 : vector<8x128xf32>
    %c1_i32 = arith.constant 1 : i32
    %13 = arith.muli %arg0, %c1_i32 : i32
    %14 = arith.addi %13, %arg1 : i32
    %c8_i32 = arith.constant 8 : i32
    %15 = arith.muli %14, %c8_i32 : i32
    %16 = tpu.iota {dimensions = array<i32: 0>} : vector<8x128xi32>
    %17 = tpu.iota {dimensions = array<i32: 1>} : vector<8x128xi32>
    %18 = vector.broadcast %15 : i32 to vector<8x128xi32>
    %19 = arith.addi %18, %16 : vector<8x128xi32>
    %c128_i32 = arith.constant 128 : i32
    %20 = vector.broadcast %c128_i32 : i32 to vector<8x128xi32>
    %21 = arith.muli %19, %20 : vector<8x128xi32>
    %22 = arith.addi %21, %17 : vector<8x128xi32>
    %c256_i32 = arith.constant 256 : i32
    %23 = vector.broadcast %c256_i32 : i32 to vector<8x128xi32>
    %24 = arith.cmpi slt, %22, %23 : vector<8x128xi32>
    %cst_6 = arith.constant 0.000000e+00 : f32
    %25 = vector.broadcast %cst_6 : f32 to vector<8x128xf32>
    %26 = arith.select %24, %12, %25 : vector<8x128xi1>, vector<8x128xf32>
    %c0_7 = arith.constant 0 : index
    %c0_8 = arith.constant 0 : index
    %c0_9 = arith.constant 0 : index
    %27 = vector.load %arg5[%c0_7, %c0_8, %c0_9] : memref<1x8x128xf32, #tpu.memory_space<vmem>>, vector<1x8x128xf32>
    %28 = vector.shape_cast %26 : vector<8x128xf32> to vector<1x1x8x128xf32>
    %cst_10 = arith.constant dense<0.000000e+00> : vector<1x8x128xf32>
    %29 = vector.multi_reduction <add>, %28, %cst_10 [1] : vector<1x1x8x128xf32> to vector<1x8x128xf32>
    %30 = arith.addf %27, %29 : vector<1x8x128xf32>
    %c0_11 = arith.constant 0 : index
    %c0_12 = arith.constant 0 : index
    %c0_13 = arith.constant 0 : index
    %31 = vector.load %arg5[%c0_11, %c0_12, %c0_13] : memref<1x8x128xf32, #tpu.memory_space<vmem>>, vector<1x8x128xf32>
    tpu.vector_store %arg5[%c0_11, %c0_12, %c0_13], %30 {strides = array<i32>} : memref<1x8x128xf32, #tpu.memory_space<vmem>>, vector<1x8x128xf32>,
    return
  }
  func.func @transform_0(%arg0: i32, %arg1: i32) -> (i32, i32) {
    %c1_i32 = arith.constant 1 : i32
    %0 = arith.muli %arg0, %c1_i32 : i32
    %1 = arith.addi %0, %arg1 : i32
    %c0_i32 = arith.constant 0 : i32
    %2 = arith.minsi %1, %c0_i32 : i32
    %c0_i32_0 = arith.constant 0 : i32
    %c0_i32_1 = arith.constant 0 : i32
    return %2, %c0_i32_0 : i32, i32
  }
  func.func @transform_1(%arg0: i32, %arg1: i32) -> (i32, i32) {
    %c1_i32 = arith.constant 1 : i32
    %0 = arith.muli %arg0, %c1_i32 : i32
    %1 = arith.addi %0, %arg1 : i32
    %c0_i32 = arith.constant 0 : i32
    %2 = arith.minsi %1, %c0_i32 : i32
    %c0_i32_0 = arith.constant 0 : i32
    %c0_i32_1 = arith.constant 0 : i32
    return %2, %c0_i32_0 : i32, i32
  }
  func.func @transform_2(%arg0: i32, %arg1: i32) -> (i32, i32) {
    %c1_i32 = arith.constant 1 : i32
    %0 = arith.muli %arg0, %c1_i32 : i32
    %1 = arith.addi %0, %arg1 : i32
    %c0_i32 = arith.constant 0 : i32
    %2 = arith.minsi %1, %c0_i32 : i32
    %c0_i32_0 = arith.constant 0 : i32
    %c0_i32_1 = arith.constant 0 : i32
    return %2, %c0_i32_0 : i32, i32
  }
  func.func @transform_3(%arg0: i32, %arg1: i32) -> (i32, i32, i32) {
    %c0_i32 = arith.constant 0 : i32
    %c0_i32_0 = arith.constant 0 : i32
    %c0_i32_1 = arith.constant 0 : i32
    return %arg0, %c0_i32, %c0_i32_0 : i32, i32, i32
  }
}

</mosaic_0001>

<llo_original>
// kernel: tpu_custom_call.1
$region0: #{tpu_custom_call.1}
  #allocation0 [shape = 'u32[]', space=smem, size = 0x4, offset = 0x4, fixed_abs, tag = 'smem constant byte address 0x4 - core index']
  #allocation1 [shape = 'u32[144,128]{1,0:T(1,128)}', space=vmem, size = 0x12000, scoped, tag = 'internal scratch']
  %s0 = inlined_call_operand.hbm [shape: f32[2,128], index: 0, kind: input, shape index: {}]
  %s1 = inlined_call_operand.hbm [shape: f32[2,128], index: 1, kind: input, shape index: {}]
  %s2 = inlined_call_operand.vmem [shape: f32[2,128], index: 2, kind: input, shape index: {}]
  %s3 = inlined_call_operand.hbm [shape: f32[1,8,128], index: 3, kind: output, shape index: {}]
  %s4 = sld [smem:[#allocation0]]
  $region34: #{tpu_custom_call.1} parent=0
    _
  %s6 = ssub.s32 1, %s4
  %s7 = scalar_select 0, %s6, %s4
  $region1: #{tpu_custom_call.1} parent=0
    #allocation2 [shape = 'u8[4096]{0}', space=vmem, size = 0x1000, scoped, tag = 'input window, operand 0, single buffered']
    #allocation3 [shape = 's32[1]{0}', space=sflag, size = 0x4, scoped, tag = 'scoped memory for tpu_custom_call.1']
    #allocation4 [shape = 's32[1]{0}', space=sflag, size = 0x4, scoped, tag = 'scoped memory for tpu_custom_call.1']
    #allocation5 [shape = 'u8[4096]{0}', space=vmem, size = 0x1000, scoped, tag = 'input window, operand 1, single buffered']
    #allocation6 [shape = 's32[1]{0}', space=sflag, size = 0x4, scoped, tag = 'scoped memory for tpu_custom_call.1']
    #allocation7 [shape = 'u8[4096]{0}', space=vmem, size = 0x1000, scoped, tag = 'output window, operand 0, single buffered']
    %8 = vsyncpa [#allocation3], 0
    %9 = vsyncpa [#allocation6], 0
    %10 = vsyncpa [#allocation4], 0
    // Predicated region
    $region2: #{tpu_custom_call.1} parent=1 // pred_check
      _
    $region3: #{tpu_custom_call.1} parent=1 // pred_check_branch
      %12 = sbr.rel (0) target = $region5
    $region4: #{tpu_custom_call.1} parent=1 // pred_region
      %s13 = sadd.s32 0, 0
      %p14 = scmp.lt.s32.totalorder %s13, 0
      %s15 = scalar_select %p14, %s13, 0
      %s16 = smul.u32 4, %s15
      %s17 = ssub.s32 1, %s16
      %s18 = smul.u32 32, %s17
      %s20 = ssub.s32 128, %s18
      %21 = vsyncadd [#allocation3], %s20
      %p22 = scmp.ne.s32.totalorder 0, %s18
      %s23 = smul.addr %s16, 32
      %s24 = scalar_lea.hbm %s0, %s23
      %s25 = smul.u32 2, %s17
      %s26 = sshll.u32 [#allocation2], 4
      %s27 = int_to_ptr.vmem [resolvable:$true] %s26
      %s28 = sshll.u32 %s25, 4
      %32 = dma.hbm_to_vmem [thread:$0]  (%p22), %s24, %s28, %s27, [#allocation3], 32, 32, 2
    $region5: #{tpu_custom_call.1} parent=1 // pred_fallthru
      _
    // Predicated region
    $region6: #{tpu_custom_call.1} parent=1 // pred_check
      _
    $region7: #{tpu_custom_call.1} parent=1 // pred_check_branch
      %34 = sbr.rel (0) target = $region9
    $region8: #{tpu_custom_call.1} parent=1 // pred_region
      %s35 = sadd.s32 0, 0
      %p36 = scmp.lt.s32.totalorder %s35, 0
      %s37 = scalar_select %p36, %s35, 0
      %s38 = smul.u32 4, %s37
      %s39 = ssub.s32 1, %s38
      %s40 = smul.u32 32, %s39
      %s42 = ssub.s32 128, %s40
      %43 = vsyncadd [#allocation6], %s42
      %p44 = scmp.ne.s32.totalorder 0, %s40
      %s45 = smul.addr %s38, 32
      %s46 = scalar_lea.hbm %s1, %s45
      %s47 = smul.u32 2, %s39
      %s48 = sshll.u32 [#allocation5], 4
      %s49 = int_to_ptr.vmem [resolvable:$true] %s48
      %s50 = sshll.u32 %s47, 4
      %54 = dma.hbm_to_vmem [thread:$0]  (%p44), %s46, %s50, %s49, [#allocation6], 32, 32, 2
    $region9: #{tpu_custom_call.1} parent=1 // pred_fallthru
      _
    // Predicated region
    $region10: #{tpu_custom_call.1} parent=1 // pred_check
      _
    $region11: #{tpu_custom_call.1} parent=1 // pred_check_branch
      %56 = sbr.rel (0) target = $region13
    $region12: #{tpu_custom_call.1} parent=1 // pred_region
      %s57 = sadd.s32 0, 0
      %p58 = scmp.lt.s32.totalorder %s57, 0
      %s59 = scalar_select %p58, %s57, 0
      %s60 = smul.u32 4, %s59
      %s61 = ssub.s32 1, %s60
      %s62 = smul.u32 32, %s61
      %p63 = scmp.lt.s32.totalorder %s60, 0
      %s64 = scalar_select %p63, %s60, 0
      %s65 = smul.addr %s64, 2
      %s66 = scalar_lea.vmem %s2, %s65
      %s67 = sadd.s32 0, 0
      %p68 = scmp.lt.s32.totalorder %s67, 0
      %s69 = scalar_select %p68, %s67, 0
      %s70 = smul.u32 4, %s69
      %s71 = ssub.s32 1, %s70
      %s72 = smul.u32 32, %s71
    $region13: #{tpu_custom_call.1} parent=1 // pred_fallthru
      _
    // Predicated region
    $region14: #{tpu_custom_call.1} parent=1 // pred_check
      _
    $region15: #{tpu_custom_call.1} parent=1 // pred_check_branch
      %74 = sbr.rel (0) target = $region17
    $region16: #{tpu_custom_call.1} parent=1 // pred_region
      %75 = dma.done [#allocation3], 128
    $region17: #{tpu_custom_call.1} parent=1 // pred_fallthru
      _
    // Predicated region
    $region18: #{tpu_custom_call.1} parent=1 // pred_check
      _
    $region19: #{tpu_custom_call.1} parent=1 // pred_check_branch
      %77 = sbr.rel (0) target = $region21
    $region20: #{tpu_custom_call.1} parent=1 // pred_region
      %78 = dma.done [#allocation6], 128
    $region21: #{tpu_custom_call.1} parent=1 // pred_fallthru
      _
    %s79 = sadd.s32 0, 0
    %p80 = scmp.lt.s32.totalorder %s79, 0
    %s81 = scalar_select %p80, %s79, 0
    %s82 = smul.u32 4, %s81
    %s83 = ssub.s32 1, %s82
    %s84 = smul.u32 32, %s83
    %p85 = scmp.lt.s32.totalorder %s82, 0
    %s86 = scalar_select %p85, %s82, 0
    %s87 = smul.addr %s86, 2
    %s88 = scalar_lea.vmem %s2, %s87
    %s89 = sadd.s32 0, 0
    %p90 = scmp.lt.s32.totalorder %s89, 0
    %s91 = scalar_select %p90, %s89, 0
    %s92 = smul.u32 4, %s91
    %s93 = ssub.s32 1, %s92
    %s94 = smul.u32 32, %s93
    %s95 = sadd.s32 0, 0
    %p96 = scmp.lt.s32.totalorder %s95, 0
    %s97 = scalar_select %p96, %s95, 0
    %s98 = smul.u32 4, %s97
    %s99 = ssub.s32 1, %s98
    %s100 = smul.u32 32, %s99
    %s101 = sadd.s32 0, 0
    %p102 = scmp.lt.s32.totalorder %s101, 0
    %s103 = scalar_select %p102, %s101, 0
    %s104 = smul.u32 4, %s103
    %s105 = ssub.s32 1, %s104
    %s106 = smul.u32 32, %s105
    %p107 = scmp.lt.s32.totalorder %s104, 0
    %s108 = scalar_select %p107, %s104, 0
    %s109 = smul.addr %s108, 2
    %s110 = scalar_lea.vmem %s2, %s109
    %s111 = sadd.s32 0, 0
    %p112 = scmp.lt.s32.totalorder %s111, 0
    %s113 = scalar_select %p112, %s111, 0
    %s114 = smul.u32 4, %s113
    %s115 = ssub.s32 1, %s114
    %s116 = smul.u32 32, %s115
    %p117 = scmp.eq.s32.totalorder 0, 0
    // Predicated region
    $region22: #{tpu_custom_call.1} parent=1 // pred_check
      %p118 = pneg %p117
    $region23: #{tpu_custom_call.1} parent=1 // pred_check_branch
      %120 = sbr.rel (%p118) target = $region25
    $region24: #{tpu_custom_call.1} parent=1 // pred_region
      %121 = vst [vmem:[#allocation7] sm:$0xff] 0.0
    $region25: #{tpu_custom_call.1} parent=1 // pred_fallthru
      _
    %v122 = vld [vmem:[#allocation2] sm:$0xff]
    %v123 = vld [vmem:[#allocation5] sm:$0xff]
    %v124 = vld [vmem:[%s110] sm:$0xff]
    %v125 = vsub.f32 %v124, %v122
    %v126 = vrcp.pop %v123
    %v127 = vmul.f32 %v125, %v126
    %v128 = vmul.f32 %v127, %v127
    %v129 = vmul.f32 %v128, -0.5
    %v130 = vlog2.pop %v123
    %v131 = vmul.f32 %v130, 0.6931472
    %v132 = vsub.f32 %v129, %v131
    %s133 = sadd.s32 0, 0
    %s134 = smul.u32 %s133, 8
    %v135 = vlaneseq
    %v136 = vshrl.u32 %v135, 7
    %v137 = vlaneseq
    %v138 = vand.u32 %v137, 127
    %v139 = vstv %s134
    %v140 = vadd.s32 %v139, %v136
    %v141 = vmul.u32 %v140, 128
    %v142 = vadd.s32 %v141, %v138
    %vm143 = vcmp.lt.s32.totalorder %v142, 256
    %v144 = vsel %vm143, %v132, 0.0
    %v145 = vld [vmem:[#allocation7] sm:$0xff]
    %v146 = vadd.f32 %v144, 0.0
    %v147 = vadd.f32 %v145, %v146
    %148 = vst [vmem:[#allocation7] sm:$0xff] %v147
    // Predicated region
    $region26: #{tpu_custom_call.1} parent=1 // pred_check
      _
    $region27: #{tpu_custom_call.1} parent=1 // pred_check_branch
      %150 = sbr.rel (0) target = $region29
    $region28: #{tpu_custom_call.1} parent=1 // pred_region
      %s152 = ssub.s32 128, 128
      %153 = vsyncadd [#allocation4], %s152
      %s155 = sshll.u32 [#allocation7], 4
      %s156 = int_to_ptr.vmem [resolvable:$true] %s155
      %158 = dma.vmem_to_hbm [thread:$0]  %s156, 128, %s3, [#allocation4]
    $region29: #{tpu_custom_call.1} parent=1 // pred_fallthru
      _
    // Predicated region
    $region30: #{tpu_custom_call.1} parent=1 // pred_check
      _
    $region31: #{tpu_custom_call.1} parent=1 // pred_check_branch
      %160 = sbr.rel (0) target = $region33
    $region32: #{tpu_custom_call.1} parent=1 // pred_region
      %161 = dma.done [#allocation4], 128
    $region33: #{tpu_custom_call.1} parent=1 // pred_fallthru
      _
    %162 = vsyncpa [#allocation3], 1
    %163 = vsyncpa [#allocation6], 1
    %164 = vsyncpa [#allocation4], 1

</llo_original>
